<compile_context>
chip_gen: v5e
topology: v5e:2x2
jax: 0.10.0
libtpu: 0.0.40
codegen_flags: <defaults>
</compile_context>

<pallas_src>
import functools

import jax
import jax.numpy as jnp
from jax.experimental import pallas as pl
from jax.experimental.pallas import tpu as pltpu


# ---------------------------------------------------------------------------
# Kernel
# ---------------------------------------------------------------------------
def _value_mlp_kernel(xt_ref, w1t_ref, b1_ref, w2t_ref, b2_ref, w3_ref, b3_ref,
                      out_ref):
    """One batch tile, fully transposed so the batch sits on the lane axis.

    xt_ref : (D,  tm)  compute_dtype  batch tile of x^T
    w1t_ref: (Hp, D)   compute_dtype  fc1 weight^T, zero-padded to Hp
    b1_ref : (Hp, 1)   f32
    w2t_ref: (Hp, Hp)  compute_dtype  fc2 weight^T, zero-padded
    b2_ref : (Hp, 1)   f32
    w3_ref : (Hp, 1)   f32            fc3 weight column, zero-padded
    b3_ref : (1,)      f32 in SMEM    fc3 bias scalar
    out_ref: (1,  tm)  f32            lane-dense row of values
    """
    w_dtype = w1t_ref.dtype

    # fc1 + relu: MXU matmul, f32 accumulation, f32 bias add.
    h1 = jnp.dot(w1t_ref[...], xt_ref[...],
                 preferred_element_type=jnp.float32)              # (Hp, tm)
    h1 = jnp.maximum(h1 + b1_ref[...], 0.0)

    # fc2 + relu.
    h2 = jnp.dot(w2t_ref[...], h1.astype(w_dtype),
                 preferred_element_type=jnp.float32)              # (Hp, tm)
    h2 = jnp.maximum(h2 + b2_ref[...], 0.0)

    # fc3: VPU multiply + sublane (XLU) reduce -> result is already lane-dense
    # (1, tm), so the store below is an unmasked, full-lane vst.
    v = jnp.sum(h2 * w3_ref[...], axis=0, keepdims=True) + b3_ref[0]
    out_ref[...] = v.astype(out_ref.dtype)                        # (1, tm)


# ---------------------------------------------------------------------------
# One-time parameter preparation (hoisted out of the per-call path)
# ---------------------------------------------------------------------------
def prepare_value_network_params(params, *, compute_dtype=jnp.bfloat16):
    """Transpose, zero-pad H to a multiple of 128 and cast -- done ONCE.

    Padding is exact: padded h1/h2 rows are relu(0 + 0) = 0 and the padded
    w2^T columns / w3 rows are 0, so they contribute nothing.
    """
    w1, b1, w2, b2, w3, b3 = (params[k] for k in ("w1", "b1", "w2", "b2",
                                                  "w3", "b3"))
    D, H = w1.shape
    Hp = ((H + 127) // 128) * 128
    p = Hp - H

    w1t = jnp.pad(w1.T, ((0, p), (0, 0))).astype(compute_dtype)       # (Hp, D)
    b1c = jnp.pad(b1.reshape(H, 1), ((0, p), (0, 0))).astype(jnp.float32)
    w2t = jnp.pad(w2.T, ((0, p), (0, p))).astype(compute_dtype)       # (Hp, Hp)
    b2c = jnp.pad(b2.reshape(H, 1), ((0, p), (0, 0))).astype(jnp.float32)
    w3c = jnp.pad(w3.reshape(H, 1), ((0, p), (0, 0))).astype(jnp.float32)
    b3s = b3.reshape((1,)).astype(jnp.float32)                         # SMEM scalar

    return {"w1t": w1t, "b1": b1c, "w2t": w2t, "b2": b2c,
            "w3": w3c, "b3": b3s}


def _choose_batch_tile(batch, block_m):
    """Batch tile: one step if it fits, else an even, balanced step count."""
    if batch <= block_m:
        return batch, 1                      # single full-array block
    # Even number of grid steps so v7x's 2 TensorCores get balanced work
    # (dimension_semantics=("parallel",)); tm is a multiple of 128 so every
    # non-final block is lane-aligned.  block_m is a soft cap.
    pairs = max(1, int(round(batch / (2.0 * block_m))))
    tm = ((pl.cdiv(batch, 2 * pairs) + 127) // 128) * 128
    tm = min(tm, batch)
    return tm, pl.cdiv(batch, tm)


# ---------------------------------------------------------------------------
# Forward pass (per-call path: x.T + cast, then one pallas_call)
# ---------------------------------------------------------------------------
@functools.partial(jax.jit, static_argnames=("block_m",))
def value_network_forward(x, prepared, *, block_m=2048):
    """ValueNetwork forward: (B, D) f32 -> (B, 1) f32."""
    B, D = x.shape
    w1t = prepared["w1t"]
    Hp = w1t.shape[0]

    xt = x.T.astype(w1t.dtype)                       # (D, B), fused transpose+cast
    tm, grid = _choose_batch_tile(B, block_m)

    rep = lambda shape: pl.BlockSpec(shape, lambda i: (0, 0))   # grid-invariant

    out = pl.pallas_call(
        _value_mlp_kernel,
        out_shape=jax.ShapeDtypeStruct((1, B), jnp.float32),
        grid_spec=pltpu.PrefetchScalarGridSpec(
            num_scalar_prefetch=0,
            grid=(grid,),
            in_specs=[
                pl.BlockSpec((D, tm), lambda i: (0, i)),            # x^T tile
                rep((Hp, D)),                                       # w1^T
                rep((Hp, 1)),                                       # b1
                rep((Hp, Hp)),                                      # w2^T
                rep((Hp, 1)),                                       # b2
                rep((Hp, 1)),                                       # w3 column
                pl.BlockSpec(memory_space=pltpu.MemorySpace.SMEM),  # b3 scalar
            ],
            out_specs=pl.BlockSpec((1, tm), lambda i: (0, i)),      # lane-dense
        ),
        compiler_params=pltpu.CompilerParams(
            dimension_semantics=("parallel",),
        ),
    )(xt, w1t, prepared["b1"], prepared["w2t"], prepared["b2"],
      prepared["w3"], prepared["b3"])

    return out.reshape(B, 1)


# ---------------------------------------------------------------------------
# Init (matches PyTorch _initialize_weights) and pure-JAX reference
# ---------------------------------------------------------------------------
def init_value_network_params(key, input_dim, hidden_dim=64):
    """Xavier-uniform weights, zero biases. Stored as (in, out) for x @ W."""
    k1, k2, k3 = jax.random.split(key, 3)

    def xavier(k, fan_in, fan_out):
        bound = jnp.sqrt(6.0 / (fan_in + fan_out))
        return jax.random.uniform(k, (fan_in, fan_out), jnp.float32,
                                  minval=-bound, maxval=bound)

    return {
        "w1": xavier(k1, input_dim, hidden_dim),
        "b1": jnp.zeros((1, hidden_dim), jnp.float32),
        "w2": xavier(k2, hidden_dim, hidden_dim),
        "b2": jnp.zeros((1, hidden_dim), jnp.float32),
        "w3": xavier(k3, hidden_dim, 1),
        "b3": jnp.zeros((1, 1), jnp.float32),
    }


def _reference(x, p):
    dot = lambda a, b: jnp.dot(a, b, precision=jax.lax.Precision.HIGHEST)
    h1 = jnp.maximum(dot(x, p["w1"]) + p["b1"], 0.0)
    h2 = jnp.maximum(dot(h1, p["w2"]) + p["b2"], 0.0)
    return dot(h2, p["w3"]) + p["b3"]


if __name__ == "__main__":
    key = jax.random.PRNGKey(0)
    k_params, k_x1, k_x2 = jax.random.split(key, 3)

    input_dim, hidden_dim = 4, 64
    params = init_value_network_params(k_params, input_dim, hidden_dim)

    # f32 compute path, small batch (typical RL value-head call, single step).
    prep_f32 = prepare_value_network_params(params, compute_dtype=jnp.float32)
    x_small = jax.random.normal(k_x1, (8, input_dim), jnp.float32)
    v_small = jax.block_until_ready(value_network_forward(x_small, prep_f32))
    ref_small = _reference(x_small, params)
    assert v_small.shape == (8, 1)
    assert jnp.allclose(v_small, ref_small, atol=1e-4, rtol=1e-4)

    # Default bf16-matmul path, larger non-multiple batch with a small block_m
    # so the multi-step tiled grid + partial last block is exercised.
    prep_bf16 = prepare_value_network_params(params)     # bf16 default
    x_big = jax.random.normal(k_x2, (1037, input_dim), jnp.float32)
    v_big = jax.block_until_ready(
        value_network_forward(x_big, prep_bf16, block_m=256))
    ref_big = _reference(x_big, params)
    assert v_big.shape == (1037, 1)
    assert jnp.allclose(v_big, ref_big, atol=5e-2, rtol=5e-2)

    # Default large-tile path (block_m=2048 -> single grid step here), f32.
    v_one = jax.block_until_ready(value_network_forward(x_big, prep_f32))
    assert jnp.allclose(v_one, ref_big, atol=1e-4, rtol=1e-4)

    print("KERNEL_OK")
</pallas_src>

<mosaic_0001>
module attributes {stable_mosaic.version = 11 : i64} {
  func.func @_value_mlp_kernel(%arg0: i32, %arg1: memref<4x8xf32, #tpu.memory_space<vmem>>, %arg2: memref<128x4xf32, #tpu.memory_space<vmem>>, %arg3: memref<128x1xf32, #tpu.memory_space<vmem>>, %arg4: memref<128x128xf32, #tpu.memory_space<vmem>>, %arg5: memref<128x1xf32, #tpu.memory_space<vmem>>, %arg6: memref<128x1xf32, #tpu.memory_space<vmem>>, %arg7: memref<1xf32, #tpu.memory_space<smem>>, %arg8: memref<1x8xf32, #tpu.memory_space<vmem>>) attributes {dimension_semantics = [#tpu.dimension_semantics<parallel>], iteration_bounds = array<i64: 1>, scalar_prefetch = 0 : i64, scratch_operands = 0 : i64, tpu.core_type = #tpu.core_type<tc>, window_params = [{transform_indices = @transform_0, window_bounds = array<i64: 4, 8>}, {pipeline_mode = #tpu.pipeline_mode<synchronous>, transform_indices = @transform_1, window_bounds = array<i64: 128, 4>}, {pipeline_mode = #tpu.pipeline_mode<synchronous>, transform_indices = @transform_2, window_bounds = array<i64: 128, 1>}, {pipeline_mode = #tpu.pipeline_mode<synchronous>, transform_indices = @transform_3, window_bounds = array<i64: 128, 128>}, {pipeline_mode = #tpu.pipeline_mode<synchronous>, transform_indices = @transform_4, window_bounds = array<i64: 128, 1>}, {pipeline_mode = #tpu.pipeline_mode<synchronous>, transform_indices = @transform_5, window_bounds = array<i64: 128, 1>}, {transform_indices = @transform_6, window_bounds = array<i64: 1>}, {transform_indices = @transform_7, window_bounds = array<i64: 1, 8>}]} {
    %c0 = arith.constant 0 : index
    %c0_0 = arith.constant 0 : index
    %0 = vector.load %arg2[%c0, %c0_0] : memref<128x4xf32, #tpu.memory_space<vmem>>, vector<128x4xf32>
    %c0_1 = arith.constant 0 : index
    %c0_2 = arith.constant 0 : index
    %1 = vector.load %arg1[%c0_1, %c0_2] : memref<4x8xf32, #tpu.memory_space<vmem>>, vector<4x8xf32>
    %cst = arith.constant dense<0.000000e+00> : vector<128x8xf32>
    %2 = tpu.matmul %0, %1, %cst {dimension_numbers = #tpu.dot_dimension_numbers<[1], [0], [0], [1], [0, 0, 1, 1], [], []>} : vector<128x4xf32>, vector<4x8xf32>, vector<128x8xf32> -> vector<128x8xf32>
    %c0_3 = arith.constant 0 : index
    %c0_4 = arith.constant 0 : index
    %3 = vector.load %arg3[%c0_3, %c0_4] : memref<128x1xf32, #tpu.memory_space<vmem>>, vector<128x1xf32>
    %4 = vector.broadcast %3 : vector<128x1xf32> to vector<128x8xf32>
    %5 = arith.addf %2, %4 : vector<128x8xf32>
    %cst_5 = arith.constant 0.000000e+00 : f32
    %6 = vector.broadcast %cst_5 : f32 to vector<128x8xf32>
    %7 = arith.maximumf %5, %6 : vector<128x8xf32>
    %c0_6 = arith.constant 0 : index
    %c0_7 = arith.constant 0 : index
    %8 = vector.load %arg4[%c0_6, %c0_7] : memref<128x128xf32, #tpu.memory_space<vmem>>, vector<128x128xf32>
    %cst_8 = arith.constant dense<0.000000e+00> : vector<128x8xf32>
    %9 = tpu.matmul %8, %7, %cst_8 {dimension_numbers = #tpu.dot_dimension_numbers<[1], [0], [0], [1], [0, 0, 1, 1], [], []>} : vector<128x128xf32>, vector<128x8xf32>, vector<128x8xf32> -> vector<128x8xf32>
    %c0_9 = arith.constant 0 : index
    %c0_10 = arith.constant 0 : index
    %10 = vector.load %arg5[%c0_9, %c0_10] : memref<128x1xf32, #tpu.memory_space<vmem>>, vector<128x1xf32>
    %11 = vector.broadcast %10 : vector<128x1xf32> to vector<128x8xf32>
    %12 = arith.addf %9, %11 : vector<128x8xf32>
    %cst_11 = arith.constant 0.000000e+00 : f32
    %13 = vector.broadcast %cst_11 : f32 to vector<128x8xf32>
    %14 = arith.maximumf %12, %13 : vector<128x8xf32>
    %c0_12 = arith.constant 0 : index
    %c0_13 = arith.constant 0 : index
    %15 = vector.load %arg6[%c0_12, %c0_13] : memref<128x1xf32, #tpu.memory_space<vmem>>, vector<128x1xf32>
    %16 = vector.broadcast %15 : vector<128x1xf32> to vector<128x8xf32>
    %17 = arith.mulf %14, %16 : vector<128x8xf32>
    %cst_14 = arith.constant dense<0.000000e+00> : vector<8xf32>
    %18 = vector.multi_reduction <add>, %17, %cst_14 [0] : vector<128x8xf32> to vector<8xf32>
    %19 = vector.shape_cast %18 : vector<8xf32> to vector<1x8xf32>
    %c0_15 = arith.constant 0 : index
    %20 = memref.load %arg7[%c0_15] : memref<1xf32, #tpu.memory_space<smem>>
    %21 = vector.broadcast %20 : f32 to vector<1x8xf32>
    %22 = arith.addf %19, %21 : vector<1x8xf32>
    %c0_16 = arith.constant 0 : index
    %c0_17 = arith.constant 0 : index
    %23 = vector.load %arg8[%c0_16, %c0_17] : memref<1x8xf32, #tpu.memory_space<vmem>>, vector<1x8xf32>
    tpu.vector_store %arg8[%c0_16, %c0_17], %22 {strides = array<i32>} : memref<1x8xf32, #tpu.memory_space<vmem>>, vector<1x8xf32>,
    return
  }
  func.func @transform_0(%arg0: i32) -> (i32, i32) {
    %c0_i32 = arith.constant 0 : i32
    %c0_i32_0 = arith.constant 0 : i32
    return %c0_i32, %arg0 : i32, i32
  }
  func.func @transform_1(%arg0: i32) -> (i32, i32) {
    %c0_i32 = arith.constant 0 : i32
    %c0_i32_0 = arith.constant 0 : i32
    %c0_i32_1 = arith.constant 0 : i32
    return %c0_i32, %c0_i32_0 : i32, i32
  }
  func.func @transform_2(%arg0: i32) -> (i32, i32) {
    %c0_i32 = arith.constant 0 : i32
    %c0_i32_0 = arith.constant 0 : i32
    %c0_i32_1 = arith.constant 0 : i32
    return %c0_i32, %c0_i32_0 : i32, i32
  }
  func.func @transform_3(%arg0: i32) -> (i32, i32) {
    %c0_i32 = arith.constant 0 : i32
    %c0_i32_0 = arith.constant 0 : i32
    %c0_i32_1 = arith.constant 0 : i32
    return %c0_i32, %c0_i32_0 : i32, i32
  }
  func.func @transform_4(%arg0: i32) -> (i32, i32) {
    %c0_i32 = arith.constant 0 : i32
    %c0_i32_0 = arith.constant 0 : i32
    %c0_i32_1 = arith.constant 0 : i32
    return %c0_i32, %c0_i32_0 : i32, i32
  }
  func.func @transform_5(%arg0: i32) -> (i32, i32) {
    %c0_i32 = arith.constant 0 : i32
    %c0_i32_0 = arith.constant 0 : i32
    %c0_i32_1 = arith.constant 0 : i32
    return %c0_i32, %c0_i32_0 : i32, i32
  }
  func.func @transform_6(%arg0: i32) -> i32 {
    %c0_i32 = arith.constant 0 : i32
    %c0_i32_0 = arith.constant 0 : i32
    return %c0_i32 : i32
  }
  func.func @transform_7(%arg0: i32) -> (i32, i32) {
    %c0_i32 = arith.constant 0 : i32
    %c0_i32_0 = arith.constant 0 : i32
    return %c0_i32, %arg0 : i32, i32
  }
}

</mosaic_0001>

<llo_original>
// kernel: value_network_forward.1
$region0: #{value_network_forward.1}
  #allocation0 [shape = 'u32[]', space=smem, size = 0x4, offset = 0x4, fixed_abs, tag = 'smem constant byte address 0x4 - core index']
  #allocation1 [shape = 'u32[72,128]{1,0:T(1,128)}', space=vmem, size = 0x9000, scoped, tag = 'internal scratch']
  #allocation2 [shape = 'f32[1]{0:T(128)S(6)}', space=smem, size = 0x200, scoped, tag = 'scoped memory for value_network_forward.1']
  %s0 = inlined_call_operand.vmem [shape: f32[4,8], index: 0, kind: input, shape index: {}]
  %s1 = inlined_call_operand.vmem [shape: f32[128,4], index: 1, kind: input, shape index: {}]
  %s2 = inlined_call_operand.vmem [shape: f32[128,1], index: 2, kind: input, shape index: {}]
  %s3 = inlined_call_operand.vmem [shape: f32[128,128], index: 3, kind: input, shape index: {}]
  %s4 = inlined_call_operand.vmem [shape: f32[128,1], index: 4, kind: input, shape index: {}]
  %s5 = inlined_call_operand.vmem [shape: f32[128,1], index: 5, kind: input, shape index: {}]
  %s6 = inlined_call_operand.<no memory space> [shape: f32[1], index: 6, kind: input, shape index: {}]
  %s7 = inlined_call_operand.hbm [shape: f32[1,8], index: 7, kind: output, shape index: {}]
  %s8 = sld [smem:[#allocation0]]
  $region38: #{value_network_forward.1} parent=0
    _
  %s10 = ssub.s32 1, %s8
  %s11 = scalar_select 0, %s10, %s8
  %12 = sst [smem:[#allocation2]] %s6
  $region1: #{value_network_forward.1} parent=0
    #allocation3 [shape = 'u8[512]{0}', space=vmem, size = 0x400, scoped, tag = 'output window, operand 0, single buffered']
    #allocation4 [shape = 's32[1]{0}', space=sflag, size = 0x4, scoped, tag = 'scoped memory for value_network_forward.1']
    %13 = vsyncpa [#allocation4], 0
    // Predicated region
    $region2: #{value_network_forward.1} parent=1 // pred_check
      _
    $region3: #{value_network_forward.1} parent=1 // pred_check_branch
      %15 = sbr.rel (0) target = $region5
    $region4: #{value_network_forward.1} parent=1 // pred_region
      _
    $region5: #{value_network_forward.1} parent=1 // pred_fallthru
      _
    // Predicated region
    $region6: #{value_network_forward.1} parent=1 // pred_check
      _
    $region7: #{value_network_forward.1} parent=1 // pred_check_branch
      %17 = sbr.rel (0) target = $region9
    $region8: #{value_network_forward.1} parent=1 // pred_region
      _
    $region9: #{value_network_forward.1} parent=1 // pred_fallthru
      _
    // Predicated region
    $region10: #{value_network_forward.1} parent=1 // pred_check
      _
    $region11: #{value_network_forward.1} parent=1 // pred_check_branch
      %19 = sbr.rel (0) target = $region13
    $region12: #{value_network_forward.1} parent=1 // pred_region
      _
    $region13: #{value_network_forward.1} parent=1 // pred_fallthru
      _
    // Predicated region
    $region14: #{value_network_forward.1} parent=1 // pred_check
      _
    $region15: #{value_network_forward.1} parent=1 // pred_check_branch
      %21 = sbr.rel (0) target = $region17
    $region16: #{value_network_forward.1} parent=1 // pred_region
      _
    $region17: #{value_network_forward.1} parent=1 // pred_fallthru
      _
    // Predicated region
    $region18: #{value_network_forward.1} parent=1 // pred_check
      _
    $region19: #{value_network_forward.1} parent=1 // pred_check_branch
      %23 = sbr.rel (0) target = $region21
    $region20: #{value_network_forward.1} parent=1 // pred_region
      _
    $region21: #{value_network_forward.1} parent=1 // pred_fallthru
      _
    // Predicated region
    $region22: #{value_network_forward.1} parent=1 // pred_check
      _
    $region23: #{value_network_forward.1} parent=1 // pred_check_branch
      %25 = sbr.rel (0) target = $region25
    $region24: #{value_network_forward.1} parent=1 // pred_region
      _
    $region25: #{value_network_forward.1} parent=1 // pred_fallthru
      _
    // Predicated region
    $region26: #{value_network_forward.1} parent=1 // pred_check
      _
    $region27: #{value_network_forward.1} parent=1 // pred_check_branch
      %27 = sbr.rel (0) target = $region29
    $region28: #{value_network_forward.1} parent=1 // pred_region
      _
    $region29: #{value_network_forward.1} parent=1 // pred_fallthru
      _
    %v28 = vld [vmem:[%s1] sm:$0xff]
    %v29 = vld [vmem:[%s1 + $0x8] sm:$0xff]
    %v30 = vld [vmem:[%s1 + $0x10] sm:$0xff]
    %v31 = vld [vmem:[%s1 + $0x18] sm:$0xff]
    %v32 = vld [vmem:[%s1 + $0x20] sm:$0xff]
    %v33 = vld [vmem:[%s1 + $0x28] sm:$0xff]
    %v34 = vld [vmem:[%s1 + $0x30] sm:$0xff]
    %v35 = vld [vmem:[%s1 + $0x38] sm:$0xff]
    %v36 = vld [vmem:[%s1 + $0x40] sm:$0xff]
    %v37 = vld [vmem:[%s1 + $0x48] sm:$0xff]
    %v38 = vld [vmem:[%s1 + $0x50] sm:$0xff]
    %v39 = vld [vmem:[%s1 + $0x58] sm:$0xff]
    %v40 = vld [vmem:[%s1 + $0x60] sm:$0xff]
    %v41 = vld [vmem:[%s1 + $0x68] sm:$0xff]
    %v42 = vld [vmem:[%s1 + $0x70] sm:$0xff]
    %v43 = vld [vmem:[%s1 + $0x78] sm:$0xff]
    %v44 = vld [vmem:[%s0] sm:$0xf]
    %v45 = vld [vmem:[%s2] sm:$0xff]
    %v46 = vld [vmem:[%s2 + $0x8] sm:$0xff]
    %v47 = vld [vmem:[%s2 + $0x10] sm:$0xff]
    %v48 = vld [vmem:[%s2 + $0x18] sm:$0xff]
    %v49 = vld [vmem:[%s2 + $0x20] sm:$0xff]
    %v50 = vld [vmem:[%s2 + $0x28] sm:$0xff]
    %v51 = vld [vmem:[%s2 + $0x30] sm:$0xff]
    %v52 = vld [vmem:[%s2 + $0x38] sm:$0xff]
    %v53 = vld [vmem:[%s2 + $0x40] sm:$0xff]
    %v54 = vld [vmem:[%s2 + $0x48] sm:$0xff]
    %v55 = vld [vmem:[%s2 + $0x50] sm:$0xff]
    %v56 = vld [vmem:[%s2 + $0x58] sm:$0xff]
    %v57 = vld [vmem:[%s2 + $0x60] sm:$0xff]
    %v58 = vld [vmem:[%s2 + $0x68] sm:$0xff]
    %v59 = vld [vmem:[%s2 + $0x70] sm:$0xff]
    %v60 = vld [vmem:[%s2 + $0x78] sm:$0xff]
    %62 = vset.pattern.permute.xlu0 0
    %63 = vperm.xlu0 %62, %v45
    %v64 = vpop.permute.xlu0 %63
    %67 = vset.pattern.permute.xlu0 0
    %68 = vperm.xlu0 %67, %v46
    %v69 = vpop.permute.xlu0 %68
    %72 = vset.pattern.permute.xlu0 0
    %73 = vperm.xlu0 %72, %v47
    %v74 = vpop.permute.xlu0 %73
    %77 = vset.pattern.permute.xlu0 0
    %78 = vperm.xlu0 %77, %v48
    %v79 = vpop.permute.xlu0 %78
    %82 = vset.pattern.permute.xlu0 0
    %83 = vperm.xlu0 %82, %v49
    %v84 = vpop.permute.xlu0 %83
    %87 = vset.pattern.permute.xlu0 0
    %88 = vperm.xlu0 %87, %v50
    %v89 = vpop.permute.xlu0 %88
    %92 = vset.pattern.permute.xlu0 0
    %93 = vperm.xlu0 %92, %v51
    %v94 = vpop.permute.xlu0 %93
    %97 = vset.pattern.permute.xlu0 0
    %98 = vperm.xlu0 %97, %v52
    %v99 = vpop.permute.xlu0 %98
    %102 = vset.pattern.permute.xlu0 0
    %103 = vperm.xlu0 %102, %v53
    %v104 = vpop.permute.xlu0 %103
    %107 = vset.pattern.permute.xlu0 0
    %108 = vperm.xlu0 %107, %v54
    %v109 = vpop.permute.xlu0 %108
    %112 = vset.pattern.permute.xlu0 0
    %113 = vperm.xlu0 %112, %v55
    %v114 = vpop.permute.xlu0 %113
    %117 = vset.pattern.permute.xlu0 0
    %118 = vperm.xlu0 %117, %v56
    %v119 = vpop.permute.xlu0 %118
    %122 = vset.pattern.permute.xlu0 0
    %123 = vperm.xlu0 %122, %v57
    %v124 = vpop.permute.xlu0 %123
    %127 = vset.pattern.permute.xlu0 0
    %128 = vperm.xlu0 %127, %v58
    %v129 = vpop.permute.xlu0 %128
    %132 = vset.pattern.permute.xlu0 0
    %133 = vperm.xlu0 %132, %v59
    %v134 = vpop.permute.xlu0 %133
    %137 = vset.pattern.permute.xlu0 0
    %138 = vperm.xlu0 %137, %v60
    %v139 = vpop.permute.xlu0 %138
    %vm141 = vcmask 31744
    %v143 = vsel %vm141, %v28, 0
    %v146 = vsel %vm141, %v29, 0
    %v149 = vsel %vm141, %v30, 0
    %v152 = vsel %vm141, %v31, 0
    %v155 = vsel %vm141, %v32, 0
    %v158 = vsel %vm141, %v33, 0
    %v161 = vsel %vm141, %v34, 0
    %v164 = vsel %vm141, %v35, 0
    %v167 = vsel %vm141, %v36, 0
    %v170 = vsel %vm141, %v37, 0
    %v173 = vsel %vm141, %v38, 0
    %v176 = vsel %vm141, %v39, 0
    %v179 = vsel %vm141, %v40, 0
    %v182 = vsel %vm141, %v41, 0
    %v185 = vsel %vm141, %v42, 0
    %v188 = vsel %vm141, %v43, 0
    %vm190 = vcmask 1043456
    %v192 = vsel %vm190, %v44, 0
    %194 = vmatpush.msra.mxu0 0.0
    %195 = vmatpush.msra.mxu0 0.0
    %196 = vmatpush.msra.mxu0 0.0
    %197 = vmatpush.msra.mxu0 0.0
    %198 = vmatpush.msra.mxu0 0.0
    %199 = vmatpush.msra.mxu0 0.0
    %200 = vmatpush.msra.mxu0 0.0
    %201 = vmatpush.msra.mxu0 0.0
    %202 = vmatpush.msra.mxu0 0.0
    %203 = vmatpush.msra.mxu0 0.0
    %204 = vmatpush.msra.mxu0 0.0
    %205 = vmatpush.msra.mxu0 0.0
    %206 = vmatpush.msra.mxu0 0.0
    %207 = vmatpush.msra.mxu0 0.0
    %208 = vmatpush.msra.mxu0 0.0
    %209 = vmatpush.msra.mxu0 %v192
    %210 = vmatmul.f32.gmra.mxu0 %v143
    %v211 = vpop.f32.mrf.mxu0
    %v212 = vadd.f32 %v64, %v211
    %213 = vmatmul.f32.gmra.mxu0 %v146
    %v214 = vpop.f32.mrf.mxu0
    %v215 = vadd.f32 %v69, %v214
    %216 = vmatmul.f32.gmra.mxu0 %v149
    %v217 = vpop.f32.mrf.mxu0
    %v218 = vadd.f32 %v74, %v217
    %219 = vmatmul.f32.gmra.mxu0 %v152
    %v220 = vpop.f32.mrf.mxu0
    %v221 = vadd.f32 %v79, %v220
    %222 = vmatmul.f32.gmra.mxu0 %v155
    %v223 = vpop.f32.mrf.mxu0
    %v224 = vadd.f32 %v84, %v223
    %225 = vmatmul.f32.gmra.mxu0 %v158
    %v226 = vpop.f32.mrf.mxu0
    %v227 = vadd.f32 %v89, %v226
    %228 = vmatmul.f32.gmra.mxu0 %v161
    %v229 = vpop.f32.mrf.mxu0
    %v230 = vadd.f32 %v94, %v229
    %231 = vmatmul.f32.gmra.mxu0 %v164
    %v232 = vpop.f32.mrf.mxu0
    %v233 = vadd.f32 %v99, %v232
    %234 = vmatmul.f32.gmra.mxu0 %v167
    %v235 = vpop.f32.mrf.mxu0
    %v236 = vadd.f32 %v104, %v235
    %237 = vmatmul.f32.gmra.mxu0 %v170
    %v238 = vpop.f32.mrf.mxu0
    %v239 = vadd.f32 %v109, %v238
    %240 = vmatmul.f32.gmra.mxu0 %v173
    %v241 = vpop.f32.mrf.mxu0
    %v242 = vadd.f32 %v114, %v241
    %243 = vmatmul.f32.gmra.mxu0 %v176
    %v244 = vpop.f32.mrf.mxu0
    %v245 = vadd.f32 %v119, %v244
    %246 = vmatmul.f32.gmra.mxu0 %v179
    %v247 = vpop.f32.mrf.mxu0
    %v248 = vadd.f32 %v124, %v247
    %249 = vmatmul.f32.gmra.mxu0 %v182
    %v250 = vpop.f32.mrf.mxu0
    %v251 = vadd.f32 %v129, %v250
    %252 = vmatmul.f32.gmra.mxu0 %v185
    %v253 = vpop.f32.mrf.mxu0
    %v254 = vadd.f32 %v134, %v253
    %255 = vmatmul.f32.gmra.mxu0 %v188
    %v256 = vpop.f32.mrf.mxu0
    %v257 = vadd.f32 %v139, %v256
    %258 = vdwg.mxu0
    %v259 = vmax.f32 %v212, 0.0
    %v260 = vmax.f32 %v215, 0.0
    %v261 = vmax.f32 %v218, 0.0
    %v262 = vmax.f32 %v221, 0.0
    %v263 = vmax.f32 %v224, 0.0
    %v264 = vmax.f32 %v227, 0.0
    %v265 = vmax.f32 %v230, 0.0
    %v266 = vmax.f32 %v233, 0.0
    %v267 = vmax.f32 %v236, 0.0
    %v268 = vmax.f32 %v239, 0.0
    %v269 = vmax.f32 %v242, 0.0
    %v270 = vmax.f32 %v245, 0.0
    %v271 = vmax.f32 %v248, 0.0
    %v272 = vmax.f32 %v251, 0.0
    %v273 = vmax.f32 %v254, 0.0
    %v274 = vmax.f32 %v257, 0.0
    %v275 = vld [vmem:[%s3] sm:$0xff]
    %v276 = vld [vmem:[%s3 + $0x8] sm:$0xff]
    %v277 = vld [vmem:[%s3 + $0x10] sm:$0xff]
    %v278 = vld [vmem:[%s3 + $0x18] sm:$0xff]
    %v279 = vld [vmem:[%s3 + $0x20] sm:$0xff]
    %v280 = vld [vmem:[%s3 + $0x28] sm:$0xff]
    %v281 = vld [vmem:[%s3 + $0x30] sm:$0xff]
    %v282 = vld [vmem:[%s3 + $0x38] sm:$0xff]
    %v283 = vld [vmem:[%s3 + $0x40] sm:$0xff]
    %v284 = vld [vmem:[%s3 + $0x48] sm:$0xff]
    %v285 = vld [vmem:[%s3 + $0x50] sm:$0xff]
    %v286 = vld [vmem:[%s3 + $0x58] sm:$0xff]
    %v287 = vld [vmem:[%s3 + $0x60] sm:$0xff]
    %v288 = vld [vmem:[%s3 + $0x68] sm:$0xff]
    %v289 = vld [vmem:[%s3 + $0x70] sm:$0xff]
    %v290 = vld [vmem:[%s3 + $0x78] sm:$0xff]
    %v291 = vld [vmem:[%s4] sm:$0xff]
    %v292 = vld [vmem:[%s4 + $0x8] sm:$0xff]
    %v293 = vld [vmem:[%s4 + $0x10] sm:$0xff]
    %v294 = vld [vmem:[%s4 + $0x18] sm:$0xff]
    %v295 = vld [vmem:[%s4 + $0x20] sm:$0xff]
    %v296 = vld [vmem:[%s4 + $0x28] sm:$0xff]
    %v297 = vld [vmem:[%s4 + $0x30] sm:$0xff]
    %v298 = vld [vmem:[%s4 + $0x38] sm:$0xff]
    %v299 = vld [vmem:[%s4 + $0x40] sm:$0xff]
    %v300 = vld [vmem:[%s4 + $0x48] sm:$0xff]
    %v301 = vld [vmem:[%s4 + $0x50] sm:$0xff]
    %v302 = vld [vmem:[%s4 + $0x58] sm:$0xff]
    %v303 = vld [vmem:[%s4 + $0x60] sm:$0xff]
    %v304 = vld [vmem:[%s4 + $0x68] sm:$0xff]
    %v305 = vld [vmem:[%s4 + $0x70] sm:$0xff]
    %v306 = vld [vmem:[%s4 + $0x78] sm:$0xff]
    %308 = vset.pattern.permute.xlu0 0
    %309 = vperm.xlu0 %308, %v291
    %v310 = vpop.permute.xlu0 %309
    %313 = vset.pattern.permute.xlu0 0
    %314 = vperm.xlu0 %313, %v292
    %v315 = vpop.permute.xlu0 %314
    %318 = vset.pattern.permute.xlu0 0
    %319 = vperm.xlu0 %318, %v293
    %v320 = vpop.permute.xlu0 %319
    %323 = vset.pattern.permute.xlu0 0
    %324 = vperm.xlu0 %323, %v294
    %v325 = vpop.permute.xlu0 %324
    %328 = vset.pattern.permute.xlu0 0
    %329 = vperm.xlu0 %328, %v295
    %v330 = vpop.permute.xlu0 %329
    %333 = vset.pattern.permute.xlu0 0
    %334 = vperm.xlu0 %333, %v296
    %v335 = vpop.permute.xlu0 %334
    %338 = vset.pattern.permute.xlu0 0
    %339 = vperm.xlu0 %338, %v297
    %v340 = vpop.permute.xlu0 %339
    %343 = vset.pattern.permute.xlu0 0
    %344 = vperm.xlu0 %343, %v298
    %v345 = vpop.permute.xlu0 %344
    %348 = vset.pattern.permute.xlu0 0
    %349 = vperm.xlu0 %348, %v299
    %v350 = vpop.permute.xlu0 %349
    %353 = vset.pattern.permute.xlu0 0
    %354 = vperm.xlu0 %353, %v300
    %v355 = vpop.permute.xlu0 %354
    %358 = vset.pattern.permute.xlu0 0
    %359 = vperm.xlu0 %358, %v301
    %v360 = vpop.permute.xlu0 %359
    %363 = vset.pattern.permute.xlu0 0
    %364 = vperm.xlu0 %363, %v302
    %v365 = vpop.permute.xlu0 %364
    %368 = vset.pattern.permute.xlu0 0
    %369 = vperm.xlu0 %368, %v303
    %v370 = vpop.permute.xlu0 %369
    %373 = vset.pattern.permute.xlu0 0
    %374 = vperm.xlu0 %373, %v304
    %v375 = vpop.permute.xlu0 %374
    %378 = vset.pattern.permute.xlu0 0
    %379 = vperm.xlu0 %378, %v305
    %v380 = vpop.permute.xlu0 %379
    %383 = vset.pattern.permute.xlu0 0
    %384 = vperm.xlu0 %383, %v306
    %v385 = vpop.permute.xlu0 %384
    %387 = vmatpush.msra.mxu0 %v274
    %388 = vmatpush.msra.mxu0 %v273
    %389 = vmatpush.msra.mxu0 %v272
    %390 = vmatpush.msra.mxu0 %v271
    %391 = vmatpush.msra.mxu0 %v270
    %392 = vmatpush.msra.mxu0 %v269
    %393 = vmatpush.msra.mxu0 %v268
    %394 = vmatpush.msra.mxu0 %v267
    %395 = vmatpush.msra.mxu0 %v266
    %396 = vmatpush.msra.mxu0 %v265
    %397 = vmatpush.msra.mxu0 %v264
    %398 = vmatpush.msra.mxu0 %v263
    %399 = vmatpush.msra.mxu0 %v262
    %400 = vmatpush.msra.mxu0 %v261
    %401 = vmatpush.msra.mxu0 %v260
    %402 = vmatpush.msra.mxu0 %v259
    %403 = vmatmul.f32.gmra.mxu0 %v275
    %v404 = vpop.f32.mrf.mxu0
    %v405 = vadd.f32 %v310, %v404
    %406 = vmatmul.f32.gmra.mxu0 %v276
    %v407 = vpop.f32.mrf.mxu0
    %v408 = vadd.f32 %v315, %v407
    %409 = vmatmul.f32.gmra.mxu0 %v277
    %v410 = vpop.f32.mrf.mxu0
    %v411 = vadd.f32 %v320, %v410
    %412 = vmatmul.f32.gmra.mxu0 %v278
    %v413 = vpop.f32.mrf.mxu0
    %v414 = vadd.f32 %v325, %v413
    %415 = vmatmul.f32.gmra.mxu0 %v279
    %v416 = vpop.f32.mrf.mxu0
    %v417 = vadd.f32 %v330, %v416
    %418 = vmatmul.f32.gmra.mxu0 %v280
    %v419 = vpop.f32.mrf.mxu0
    %v420 = vadd.f32 %v335, %v419
    %421 = vmatmul.f32.gmra.mxu0 %v281
    %v422 = vpop.f32.mrf.mxu0
    %v423 = vadd.f32 %v340, %v422
    %424 = vmatmul.f32.gmra.mxu0 %v282
    %v425 = vpop.f32.mrf.mxu0
    %v426 = vadd.f32 %v345, %v425
    %427 = vmatmul.f32.gmra.mxu0 %v283
    %v428 = vpop.f32.mrf.mxu0
    %v429 = vadd.f32 %v350, %v428
    %430 = vmatmul.f32.gmra.mxu0 %v284
    %v431 = vpop.f32.mrf.mxu0
    %v432 = vadd.f32 %v355, %v431
    %433 = vmatmul.f32.gmra.mxu0 %v285
    %v434 = vpop.f32.mrf.mxu0
    %v435 = vadd.f32 %v360, %v434
    %436 = vmatmul.f32.gmra.mxu0 %v286
    %v437 = vpop.f32.mrf.mxu0
    %v438 = vadd.f32 %v365, %v437
    %439 = vmatmul.f32.gmra.mxu0 %v287
    %v440 = vpop.f32.mrf.mxu0
    %v441 = vadd.f32 %v370, %v440
    %442 = vmatmul.f32.gmra.mxu0 %v288
    %v443 = vpop.f32.mrf.mxu0
    %v444 = vadd.f32 %v375, %v443
    %445 = vmatmul.f32.gmra.mxu0 %v289
    %v446 = vpop.f32.mrf.mxu0
    %v447 = vadd.f32 %v380, %v446
    %448 = vmatmul.f32.gmra.mxu0 %v290
    %v449 = vpop.f32.mrf.mxu0
    %v450 = vadd.f32 %v385, %v449
    %451 = vdwg.mxu0
    %v452 = vmax.f32 %v405, 0.0
    %v453 = vmax.f32 %v408, 0.0
    %v454 = vmax.f32 %v411, 0.0
    %v455 = vmax.f32 %v414, 0.0
    %v456 = vmax.f32 %v417, 0.0
    %v457 = vmax.f32 %v420, 0.0
    %v458 = vmax.f32 %v423, 0.0
    %v459 = vmax.f32 %v426, 0.0
    %v460 = vmax.f32 %v429, 0.0
    %v461 = vmax.f32 %v432, 0.0
    %v462 = vmax.f32 %v435, 0.0
    %v463 = vmax.f32 %v438, 0.0
    %v464 = vmax.f32 %v441, 0.0
    %v465 = vmax.f32 %v444, 0.0
    %v466 = vmax.f32 %v447, 0.0
    %v467 = vmax.f32 %v450, 0.0
    %v468 = vld [vmem:[%s5] sm:$0xff]
    %v469 = vld [vmem:[%s5 + $0x8] sm:$0xff]
    %v470 = vld [vmem:[%s5 + $0x10] sm:$0xff]
    %v471 = vld [vmem:[%s5 + $0x18] sm:$0xff]
    %v472 = vld [vmem:[%s5 + $0x20] sm:$0xff]
    %v473 = vld [vmem:[%s5 + $0x28] sm:$0xff]
    %v474 = vld [vmem:[%s5 + $0x30] sm:$0xff]
    %v475 = vld [vmem:[%s5 + $0x38] sm:$0xff]
    %v476 = vld [vmem:[%s5 + $0x40] sm:$0xff]
    %v477 = vld [vmem:[%s5 + $0x48] sm:$0xff]
    %v478 = vld [vmem:[%s5 + $0x50] sm:$0xff]
    %v479 = vld [vmem:[%s5 + $0x58] sm:$0xff]
    %v480 = vld [vmem:[%s5 + $0x60] sm:$0xff]
    %v481 = vld [vmem:[%s5 + $0x68] sm:$0xff]
    %v482 = vld [vmem:[%s5 + $0x70] sm:$0xff]
    %v483 = vld [vmem:[%s5 + $0x78] sm:$0xff]
    %485 = vset.pattern.permute.xlu0 0
    %486 = vperm.xlu0 %485, %v468
    %v487 = vpop.permute.xlu0 %486
    %490 = vset.pattern.permute.xlu0 0
    %491 = vperm.xlu0 %490, %v469
    %v492 = vpop.permute.xlu0 %491
    %495 = vset.pattern.permute.xlu0 0
    %496 = vperm.xlu0 %495, %v470
    %v497 = vpop.permute.xlu0 %496
    %500 = vset.pattern.permute.xlu0 0
    %501 = vperm.xlu0 %500, %v471
    %v502 = vpop.permute.xlu0 %501
    %505 = vset.pattern.permute.xlu0 0
    %506 = vperm.xlu0 %505, %v472
    %v507 = vpop.permute.xlu0 %506
    %510 = vset.pattern.permute.xlu0 0
    %511 = vperm.xlu0 %510, %v473
    %v512 = vpop.permute.xlu0 %511
    %515 = vset.pattern.permute.xlu0 0
    %516 = vperm.xlu0 %515, %v474
    %v517 = vpop.permute.xlu0 %516
    %520 = vset.pattern.permute.xlu0 0
    %521 = vperm.xlu0 %520, %v475
    %v522 = vpop.permute.xlu0 %521
    %525 = vset.pattern.permute.xlu0 0
    %526 = vperm.xlu0 %525, %v476
    %v527 = vpop.permute.xlu0 %526
    %530 = vset.pattern.permute.xlu0 0
    %531 = vperm.xlu0 %530, %v477
    %v532 = vpop.permute.xlu0 %531
    %535 = vset.pattern.permute.xlu0 0
    %536 = vperm.xlu0 %535, %v478
    %v537 = vpop.permute.xlu0 %536
    %540 = vset.pattern.permute.xlu0 0
    %541 = vperm.xlu0 %540, %v479
    %v542 = vpop.permute.xlu0 %541
    %545 = vset.pattern.permute.xlu0 0
    %546 = vperm.xlu0 %545, %v480
    %v547 = vpop.permute.xlu0 %546
    %550 = vset.pattern.permute.xlu0 0
    %551 = vperm.xlu0 %550, %v481
    %v552 = vpop.permute.xlu0 %551
    %555 = vset.pattern.permute.xlu0 0
    %556 = vperm.xlu0 %555, %v482
    %v557 = vpop.permute.xlu0 %556
    %560 = vset.pattern.permute.xlu0 0
    %561 = vperm.xlu0 %560, %v483
    %v562 = vpop.permute.xlu0 %561
    %v564 = vmul.f32 %v452, %v487
    %v565 = vmul.f32 %v453, %v492
    %v566 = vmul.f32 %v454, %v497
    %v567 = vmul.f32 %v455, %v502
    %v568 = vmul.f32 %v456, %v507
    %v569 = vmul.f32 %v457, %v512
    %v570 = vmul.f32 %v458, %v517
    %v571 = vmul.f32 %v459, %v522
    %v572 = vmul.f32 %v460, %v527
    %v573 = vmul.f32 %v461, %v532
    %v574 = vmul.f32 %v462, %v537
    %v575 = vmul.f32 %v463, %v542
    %v576 = vmul.f32 %v464, %v547
    %v577 = vmul.f32 %v465, %v552
    %v578 = vmul.f32 %v466, %v557
    %v579 = vmul.f32 %v467, %v562
    %vm580 = vcmask 64512
    %v581 = vsel %vm580, %v564, 0.0
    %v582 = vsel %vm580, %v565, 0.0
    %v583 = vadd.f32 %v581, %v582
    %v584 = vsel %vm580, %v566, 0.0
    %v585 = vadd.f32 %v583, %v584
    %v586 = vsel %vm580, %v567, 0.0
    %v587 = vadd.f32 %v585, %v586
    %v588 = vsel %vm580, %v568, 0.0
    %v589 = vadd.f32 %v587, %v588
    %v590 = vsel %vm580, %v569, 0.0
    %v591 = vadd.f32 %v589, %v590
    %v592 = vsel %vm580, %v570, 0.0
    %v593 = vadd.f32 %v591, %v592
    %v594 = vsel %vm580, %v571, 0.0
    %v595 = vadd.f32 %v593, %v594
    %v596 = vsel %vm580, %v572, 0.0
    %v597 = vadd.f32 %v595, %v596
    %v598 = vsel %vm580, %v573, 0.0
    %v599 = vadd.f32 %v597, %v598
    %v600 = vsel %vm580, %v574, 0.0
    %v601 = vadd.f32 %v599, %v600
    %v602 = vsel %vm580, %v575, 0.0
    %v603 = vadd.f32 %v601, %v602
    %v604 = vsel %vm580, %v576, 0.0
    %v605 = vadd.f32 %v603, %v604
    %v606 = vsel %vm580, %v577, 0.0
    %v607 = vadd.f32 %v605, %v606
    %v608 = vsel %vm580, %v578, 0.0
    %v609 = vadd.f32 %v607, %v608
    %v610 = vsel %vm580, %v579, 0.0
    %v611 = vadd.f32 %v609, %v610
    %v612 = vrot.slane %v611, 4
    %v613 = vadd.f32 %v611, %v612
    %v614 = vrot.slane %v613, 2
    %v615 = vadd.f32 %v613, %v614
    %v616 = vrot.slane %v615, 1
    %v617 = vadd.f32 %v615, %v616
    %s618 = sld [smem:[#allocation2]]
    %v619 = vstv %s618
    %v620 = vadd.f32 %v617, %v619
    %vm621 = vcmask 57344
    %622 = vst.msk [vmem:[#allocation3] sm:$0x1] %vm621, %v620
    // Predicated region
    $region30: #{value_network_forward.1} parent=1 // pred_check
      _
    $region31: #{value_network_forward.1} parent=1 // pred_check_branch
      %624 = sbr.rel (0) target = $region33
    $region32: #{value_network_forward.1} parent=1 // pred_region
      %626 = vsyncadd [#allocation4], 0
      %s628 = sshll.u32 [#allocation3], 4
      %s629 = int_to_ptr.vmem [resolvable:$true] %s628
      %s630 = sshll.u32 %s7, 4
      %s631 = int_to_ptr.hbm [resolvable:$true] %s630
      %633 = dma.vmem_to_hbm [thread:$0]  %s629, 16, %s631, [#allocation4]
    $region33: #{value_network_forward.1} parent=1 // pred_fallthru
      _
    // Predicated region
    $region34: #{value_network_forward.1} parent=1 // pred_check
      _
    $region35: #{value_network_forward.1} parent=1 // pred_check_branch
      %635 = sbr.rel (0) target = $region37
    $region36: #{value_network_forward.1} parent=1 // pred_region
      %637 = dma.done [#allocation4], 16
    $region37: #{value_network_forward.1} parent=1 // pred_fallthru
      _
    %638 = vsyncpa [#allocation4], 1

</llo_original>
